<compile_context>
chip_gen: v5e
topology: v5e:2x2
jax: 0.10.0
libtpu: 0.0.40
codegen_flags: <defaults>
</compile_context>

<pallas_src>
import functools

import jax
import jax.numpy as jnp
from jax.experimental import pallas as pl
from jax.experimental.pallas import tpu as pltpu


def _make_mixer_kernel(n_channels):
    def kernel(*refs):
        sig_refs = refs[:n_channels]        # each (TR, TS)
        mix_ref = refs[n_channels]          # (C, TR, TS) or (C, TR, 1)
        out_ref = refs[n_channels + 1]      # (TR, TS)
        acc = sig_refs[0][...].astype(jnp.float32) * mix_ref[0].astype(jnp.float32)
        for c in range(1, n_channels):
            acc = acc + sig_refs[c][...].astype(jnp.float32) * mix_ref[c].astype(jnp.float32)
        out_ref[...] = acc.astype(out_ref.dtype)

    return kernel


def mixer(signals, mix, *, tile_rows=256, tile_samples=2048,
          vmem_budget_bytes=28 << 20):
    """signals: list of (B, E, S) arrays; mix: (B, E, S, C) or (B, E, 1, C)."""
    C = len(signals)
    B, E, S = signals[0].shape
    BE = B * E
    # Contiguous reshape — free, no stacked copy of the signals.
    sigs = [s.reshape(BE, S) for s in signals]

    is_time_series = mix.shape == (B, E, S, C)
    is_global = mix.shape == (B, E, 1, C)
    assert is_time_series or is_global

    # TODO(synk): if the producer can hand us channel-major mix ((C, B, E, S)),
    # drop this transpose — for the time-series case it is one extra HBM pass.
    mix_t = jnp.moveaxis(mix, -1, 0).reshape(C, BE, -1)   # (C, BE, S) or (C, BE, 1)

    out_dtype = functools.reduce(jnp.promote_types,
                                 [s.dtype for s in signals] + [mix.dtype])

    sig_is = jnp.dtype(signals[0].dtype).itemsize
    mix_is = jnp.dtype(mix.dtype).itemsize
    out_is = jnp.dtype(out_dtype).itemsize

    def step_bytes(tr, ts):
        mix_cols = 1 if is_global else ts
        per = C * tr * ts * sig_is + C * tr * mix_cols * mix_is + tr * ts * out_is
        return 2 * per  # double-buffered pipeline

    # Largest lane-dense blocks that fit the budget; full extents when small
    # (a block equal to the full array dim is always legal wrt (8,128) tiling).
    ts = S if S <= tile_samples else (tile_samples // 128) * 128
    tr = BE if BE <= tile_rows else (tile_rows // 8) * 8
    while step_bytes(tr, ts) > vmem_budget_bytes:
        if tr >= 32:                      # shrink rows first, keep output lane-dense
            tr = ((tr // 2) // 8) * 8
        elif ts >= 256:
            ts = ((ts // 2) // 128) * 128
        else:
            break

    grid = (pl.cdiv(BE, tr), pl.cdiv(S, ts))

    sig_spec = pl.BlockSpec((tr, ts), lambda i, j: (i, j))
    if is_time_series:
        mix_spec = pl.BlockSpec((C, tr, ts), lambda i, j: (0, i, j))
    else:
        # Block index constant along the fast (sample) axis -> block is reused,
        # not re-DMA'd, on every inner-grid step.
        mix_spec = pl.BlockSpec((C, tr, 1), lambda i, j: (0, i, 0))

    out = pl.pallas_call(
        _make_mixer_kernel(C),
        out_shape=jax.ShapeDtypeStruct((BE, S), out_dtype),
        grid_spec=pltpu.PrefetchScalarGridSpec(
            num_scalar_prefetch=0,
            grid=grid,
            in_specs=[sig_spec] * C + [mix_spec],
            out_specs=pl.BlockSpec((tr, ts), lambda i, j: (i, j)),
        ),
        compiler_params=pltpu.CompilerParams(
            dimension_semantics=("parallel", "parallel"),
            vmem_limit_bytes=48 << 20,    # > v5e/v6e/v7x scoped defaults, < v7x physical
        ),
    )(*sigs, mix_t)

    return out.reshape(B, E, S)


def _reference(signals, mix):
    stacked = jnp.stack(signals, axis=-1)                # (B, E, S, C)
    return jnp.sum(stacked * mix, axis=-1)


if __name__ == "__main__":
    key = jax.random.PRNGKey(0)
    B, E, S, C = 2, 4, 128, 3

    ks = jax.random.split(key, C + 2)
    signals = [jax.random.normal(ks[i], (B, E, S), dtype=jnp.float32) for i in range(C)]

    # time-series mix
    mix_ts = jax.random.normal(ks[C], (B, E, S, C), dtype=jnp.float32)
    out_ts = jax.block_until_ready(mixer(signals, mix_ts))
    ref_ts = _reference(signals, mix_ts)
    assert out_ts.shape == (B, E, S)
    assert jnp.allclose(out_ts, ref_ts, atol=1e-5, rtol=1e-5)

    # global mix (broadcast over samples)
    mix_gl = jax.random.normal(ks[C + 1], (B, E, 1, C), dtype=jnp.float32)
    out_gl = jax.block_until_ready(mixer(signals, mix_gl))
    ref_gl = _reference(signals, mix_gl)
    assert out_gl.shape == (B, E, S)
    assert jnp.allclose(out_gl, ref_gl, atol=1e-5, rtol=1e-5)

    # multi-block grid (explicit small tiles to exercise the tiling / reuse paths)
    B2, E2, S2 = 4, 8, 512
    ks2 = jax.random.split(jax.random.PRNGKey(1), C + 2)
    sig2 = [jax.random.normal(ks2[i], (B2, E2, S2), dtype=jnp.float32) for i in range(C)]
    mix2_ts = jax.random.normal(ks2[C], (B2, E2, S2, C), dtype=jnp.float32)
    mix2_gl = jax.random.normal(ks2[C + 1], (B2, E2, 1, C), dtype=jnp.float32)
    out2_ts = jax.block_until_ready(mixer(sig2, mix2_ts, tile_rows=16, tile_samples=128))
    out2_gl = jax.block_until_ready(mixer(sig2, mix2_gl, tile_rows=16, tile_samples=128))
    assert jnp.allclose(out2_ts, _reference(sig2, mix2_ts), atol=1e-5, rtol=1e-5)
    assert jnp.allclose(out2_gl, _reference(sig2, mix2_gl), atol=1e-5, rtol=1e-5)

    # mixed-precision path (bf16 signals, f32 mix) — checks dtype promotion
    sig3 = [s.astype(jnp.bfloat16) for s in signals]
    out3 = jax.block_until_ready(mixer(sig3, mix_ts))
    ref3 = _reference([s.astype(jnp.float32) for s in sig3], mix_ts)
    assert out3.dtype == jnp.float32
    assert jnp.allclose(out3, ref3, atol=2e-2, rtol=2e-2)

    print("KERNEL_OK")
</pallas_src>

<mosaic_0001>
module attributes {stable_mosaic.version = 11 : i64} {
  func.func @kernel(%arg0: i32, %arg1: i32, %arg2: memref<8x128xf32, #tpu.memory_space<vmem>>, %arg3: memref<8x128xf32, #tpu.memory_space<vmem>>, %arg4: memref<8x128xf32, #tpu.memory_space<vmem>>, %arg5: memref<3x8x128xf32, #tpu.memory_space<vmem>>, %arg6: memref<8x128xf32, #tpu.memory_space<vmem>>) attributes {dimension_semantics = [#tpu.dimension_semantics<parallel>, #tpu.dimension_semantics<parallel>], iteration_bounds = array<i64: 1, 1>, scalar_prefetch = 0 : i64, scratch_operands = 0 : i64, tpu.core_type = #tpu.core_type<tc>, window_params = [{transform_indices = @transform_0, window_bounds = array<i64: 8, 128>}, {transform_indices = @transform_1, window_bounds = array<i64: 8, 128>}, {transform_indices = @transform_2, window_bounds = array<i64: 8, 128>}, {transform_indices = @transform_3, window_bounds = array<i64: 3, 8, 128>}, {transform_indices = @transform_4, window_bounds = array<i64: 8, 128>}]} {
    %c0 = arith.constant 0 : index
    %c0_0 = arith.constant 0 : index
    %0 = vector.load %arg2[%c0, %c0_0] : memref<8x128xf32, #tpu.memory_space<vmem>>, vector<8x128xf32>
    %c0_1 = arith.constant 0 : index
    %c0_2 = arith.constant 0 : index
    %c0_3 = arith.constant 0 : index
    %1 = vector.load %arg5[%c0_1, %c0_2, %c0_3] : memref<3x8x128xf32, #tpu.memory_space<vmem>>, vector<1x8x128xf32>
    %2 = vector.shape_cast %1 : vector<1x8x128xf32> to vector<8x128xf32>
    %3 = arith.mulf %0, %2 : vector<8x128xf32>
    %c0_4 = arith.constant 0 : index
    %c0_5 = arith.constant 0 : index
    %4 = vector.load %arg3[%c0_4, %c0_5] : memref<8x128xf32, #tpu.memory_space<vmem>>, vector<8x128xf32>
    %c1 = arith.constant 1 : index
    %c0_6 = arith.constant 0 : index
    %c0_7 = arith.constant 0 : index
    %5 = vector.load %arg5[%c1, %c0_6, %c0_7] : memref<3x8x128xf32, #tpu.memory_space<vmem>>, vector<1x8x128xf32>
    %6 = vector.shape_cast %5 : vector<1x8x128xf32> to vector<8x128xf32>
    %7 = arith.mulf %4, %6 : vector<8x128xf32>
    %8 = arith.addf %3, %7 : vector<8x128xf32>
    %c0_8 = arith.constant 0 : index
    %c0_9 = arith.constant 0 : index
    %9 = vector.load %arg4[%c0_8, %c0_9] : memref<8x128xf32, #tpu.memory_space<vmem>>, vector<8x128xf32>
    %c2 = arith.constant 2 : index
    %c0_10 = arith.constant 0 : index
    %c0_11 = arith.constant 0 : index
    %10 = vector.load %arg5[%c2, %c0_10, %c0_11] : memref<3x8x128xf32, #tpu.memory_space<vmem>>, vector<1x8x128xf32>
    %11 = vector.shape_cast %10 : vector<1x8x128xf32> to vector<8x128xf32>
    %12 = arith.mulf %9, %11 : vector<8x128xf32>
    %13 = arith.addf %8, %12 : vector<8x128xf32>
    %c0_12 = arith.constant 0 : index
    %c0_13 = arith.constant 0 : index
    %14 = vector.load %arg6[%c0_12, %c0_13] : memref<8x128xf32, #tpu.memory_space<vmem>>, vector<8x128xf32>
    tpu.vector_store %arg6[%c0_12, %c0_13], %13 {strides = array<i32>} : memref<8x128xf32, #tpu.memory_space<vmem>>, vector<8x128xf32>,
    return
  }
  func.func @transform_0(%arg0: i32, %arg1: i32) -> (i32, i32) {
    %c0_i32 = arith.constant 0 : i32
    return %arg0, %arg1 : i32, i32
  }
  func.func @transform_1(%arg0: i32, %arg1: i32) -> (i32, i32) {
    %c0_i32 = arith.constant 0 : i32
    return %arg0, %arg1 : i32, i32
  }
  func.func @transform_2(%arg0: i32, %arg1: i32) -> (i32, i32) {
    %c0_i32 = arith.constant 0 : i32
    return %arg0, %arg1 : i32, i32
  }
  func.func @transform_3(%arg0: i32, %arg1: i32) -> (i32, i32, i32) {
    %c0_i32 = arith.constant 0 : i32
    %c0_i32_0 = arith.constant 0 : i32
    return %c0_i32, %arg0, %arg1 : i32, i32, i32
  }
  func.func @transform_4(%arg0: i32, %arg1: i32) -> (i32, i32) {
    %c0_i32 = arith.constant 0 : i32
    return %arg0, %arg1 : i32, i32
  }
}

</mosaic_0001>

<llo_original>
// kernel: tpu_custom_call.1
$region0: #{tpu_custom_call.1}
  #allocation0 [shape = 'u32[]', space=smem, size = 0x4, offset = 0x4, fixed_abs, tag = 'smem constant byte address 0x4 - core index']
  #allocation1 [shape = 'u32[72,128]{1,0:T(1,128)}', space=vmem, size = 0x9000, scoped, tag = 'internal scratch']
  %s0 = inlined_call_operand.hbm [shape: f32[8,128], index: 0, kind: input, shape index: {}]
  %s1 = inlined_call_operand.hbm [shape: f32[8,128], index: 1, kind: input, shape index: {}]
  %s2 = inlined_call_operand.hbm [shape: f32[8,128], index: 2, kind: input, shape index: {}]
  %s3 = inlined_call_operand.hbm [shape: f32[3,8,128], index: 3, kind: input, shape index: {}]
  %s4 = inlined_call_operand.hbm [shape: f32[8,128], index: 4, kind: output, shape index: {}]
  %s5 = sld [smem:[#allocation0]]
  $region42: #{tpu_custom_call.1} parent=0
    _
  %s7 = ssub.s32 1, %s5
  %s8 = scalar_select 0, %s7, %s5
  $region1: #{tpu_custom_call.1} parent=0
    #allocation2 [shape = 'u8[4096]{0}', space=vmem, size = 0x1000, scoped, tag = 'input window, operand 0, single buffered']
    #allocation3 [shape = 's32[1]{0}', space=sflag, size = 0x4, scoped, tag = 'scoped memory for tpu_custom_call.1']
    #allocation4 [shape = 's32[1]{0}', space=sflag, size = 0x4, scoped, tag = 'scoped memory for tpu_custom_call.1']
    #allocation5 [shape = 'u8[4096]{0}', space=vmem, size = 0x1000, scoped, tag = 'input window, operand 1, single buffered']
    #allocation6 [shape = 's32[1]{0}', space=sflag, size = 0x4, scoped, tag = 'scoped memory for tpu_custom_call.1']
    #allocation7 [shape = 'u8[4096]{0}', space=vmem, size = 0x1000, scoped, tag = 'input window, operand 2, single buffered']
    #allocation8 [shape = 'u8[12288]{0}', space=vmem, size = 0x3000, scoped, tag = 'input window, operand 3, single buffered']
    #allocation9 [shape = 's32[1]{0}', space=sflag, size = 0x4, scoped, tag = 'scoped memory for tpu_custom_call.1']
    #allocation10 [shape = 'u8[4096]{0}', space=vmem, size = 0x1000, scoped, tag = 'output window, operand 0, single buffered']
    %9 = vsyncpa [#allocation3], 0
    %10 = vsyncpa [#allocation6], 0
    %11 = vsyncpa [#allocation9], 0
    %12 = vsyncpa [#allocation4], 0
    // Predicated region
    $region2: #{tpu_custom_call.1} parent=1 // pred_check
      _
    $region3: #{tpu_custom_call.1} parent=1 // pred_check_branch
      %14 = sbr.rel (0) target = $region5
    $region4: #{tpu_custom_call.1} parent=1 // pred_region
      %16 = vsyncadd [#allocation3], 0
      %s18 = sshll.u32 %s0, 4
      %s19 = int_to_ptr.hbm [resolvable:$true] %s18
      %s20 = sshll.u32 [#allocation2], 4
      %s21 = int_to_ptr.vmem [resolvable:$true] %s20
      %23 = dma.hbm_to_vmem [thread:$0]  %s19, 128, %s21, [#allocation3]
    $region5: #{tpu_custom_call.1} parent=1 // pred_fallthru
      _
    // Predicated region
    $region6: #{tpu_custom_call.1} parent=1 // pred_check
      _
    $region7: #{tpu_custom_call.1} parent=1 // pred_check_branch
      %25 = sbr.rel (0) target = $region9
    $region8: #{tpu_custom_call.1} parent=1 // pred_region
      %27 = vsyncadd [#allocation6], 0
      %s29 = sshll.u32 %s1, 4
      %s30 = int_to_ptr.hbm [resolvable:$true] %s29
      %s31 = sshll.u32 [#allocation5], 4
      %s32 = int_to_ptr.vmem [resolvable:$true] %s31
      %34 = dma.hbm_to_vmem [thread:$0]  %s30, 128, %s32, [#allocation6]
    $region9: #{tpu_custom_call.1} parent=1 // pred_fallthru
      _
    // Predicated region
    $region10: #{tpu_custom_call.1} parent=1 // pred_check
      _
    $region11: #{tpu_custom_call.1} parent=1 // pred_check_branch
      %36 = sbr.rel (0) target = $region13
    $region12: #{tpu_custom_call.1} parent=1 // pred_region
      %38 = vsyncadd [#allocation6], 0
      %s40 = sshll.u32 %s2, 4
      %s41 = int_to_ptr.hbm [resolvable:$true] %s40
      %s42 = sshll.u32 [#allocation7], 4
      %s43 = int_to_ptr.vmem [resolvable:$true] %s42
      %45 = dma.hbm_to_vmem [thread:$0]  %s41, 128, %s43, [#allocation6]
    $region13: #{tpu_custom_call.1} parent=1 // pred_fallthru
      _
    // Predicated region
    $region14: #{tpu_custom_call.1} parent=1 // pred_check
      _
    $region15: #{tpu_custom_call.1} parent=1 // pred_check_branch
      %47 = sbr.rel (0) target = $region17
    $region16: #{tpu_custom_call.1} parent=1 // pred_region
      %49 = vsyncadd [#allocation9], 0
      %s50 = sshll.u32 %s3, 4
      %s51 = int_to_ptr.hbm [resolvable:$true] %s50
      %s52 = sshll.u32 [#allocation8], 4
      %s53 = int_to_ptr.vmem [resolvable:$true] %s52
      %58 = dma.hbm_to_vmem [thread:$0]  %s51, 384, %s53, [#allocation9], 128, 128, 8
    $region17: #{tpu_custom_call.1} parent=1 // pred_fallthru
      _
    // Predicated region
    $region18: #{tpu_custom_call.1} parent=1 // pred_check
      _
    $region19: #{tpu_custom_call.1} parent=1 // pred_check_branch
      %60 = sbr.rel (0) target = $region21
    $region20: #{tpu_custom_call.1} parent=1 // pred_region
      %62 = dma.done [#allocation3], 128
    $region21: #{tpu_custom_call.1} parent=1 // pred_fallthru
      _
    // Predicated region
    $region22: #{tpu_custom_call.1} parent=1 // pred_check
      _
    $region23: #{tpu_custom_call.1} parent=1 // pred_check_branch
      %64 = sbr.rel (0) target = $region25
    $region24: #{tpu_custom_call.1} parent=1 // pred_region
      %66 = dma.done [#allocation6], 128
    $region25: #{tpu_custom_call.1} parent=1 // pred_fallthru
      _
    // Predicated region
    $region26: #{tpu_custom_call.1} parent=1 // pred_check
      _
    $region27: #{tpu_custom_call.1} parent=1 // pred_check_branch
      %68 = sbr.rel (0) target = $region29
    $region28: #{tpu_custom_call.1} parent=1 // pred_region
      %70 = dma.done [#allocation6], 128
    $region29: #{tpu_custom_call.1} parent=1 // pred_fallthru
      _
    // Predicated region
    $region30: #{tpu_custom_call.1} parent=1 // pred_check
      _
    $region31: #{tpu_custom_call.1} parent=1 // pred_check_branch
      %72 = sbr.rel (0) target = $region33
    $region32: #{tpu_custom_call.1} parent=1 // pred_region
      %74 = dma.done [#allocation9], 384
    $region33: #{tpu_custom_call.1} parent=1 // pred_fallthru
      _
    %v75 = vld [vmem:[#allocation2] sm:$0xff]
    %v76 = vld [vmem:[#allocation8] sm:$0xff]
    %v77 = vmul.f32 %v75, %v76
    %v78 = vld [vmem:[#allocation5] sm:$0xff]
    %s79 = scalar_lea.vmem [#allocation8], 8
    %v80 = vld [vmem:[%s79] sm:$0xff]
    %v81 = vmul.f32 %v78, %v80
    %v82 = vadd.f32 %v77, %v81
    %v83 = vld [vmem:[#allocation7] sm:$0xff]
    %s84 = scalar_lea.vmem [#allocation8], 16
    %v85 = vld [vmem:[%s84] sm:$0xff]
    %v86 = vmul.f32 %v83, %v85
    %v87 = vadd.f32 %v82, %v86
    %88 = vst [vmem:[#allocation10] sm:$0xff] %v87
    // Predicated region
    $region34: #{tpu_custom_call.1} parent=1 // pred_check
      _
    $region35: #{tpu_custom_call.1} parent=1 // pred_check_branch
      %90 = sbr.rel (0) target = $region37
    $region36: #{tpu_custom_call.1} parent=1 // pred_region
      %92 = vsyncadd [#allocation4], 0
      %s94 = sshll.u32 [#allocation10], 4
      %s95 = int_to_ptr.vmem [resolvable:$true] %s94
      %s96 = sshll.u32 %s4, 4
      %s97 = int_to_ptr.hbm [resolvable:$true] %s96
      %99 = dma.vmem_to_hbm [thread:$0]  %s95, 128, %s97, [#allocation4]
    $region37: #{tpu_custom_call.1} parent=1 // pred_fallthru
      _
    // Predicated region
    $region38: #{tpu_custom_call.1} parent=1 // pred_check
      _
    $region39: #{tpu_custom_call.1} parent=1 // pred_check_branch
      %101 = sbr.rel (0) target = $region41
    $region40: #{tpu_custom_call.1} parent=1 // pred_region
      %103 = dma.done [#allocation4], 128
    $region41: #{tpu_custom_call.1} parent=1 // pred_fallthru
      _
    %104 = vsyncpa [#allocation3], 1
    %105 = vsyncpa [#allocation6], 1
    %106 = vsyncpa [#allocation9], 1
    %107 = vsyncpa [#allocation4], 1

</llo_original>
